<compile_context>
chip_gen: v5e
topology: v5e:2x2
jax: 0.10.0
libtpu: 0.0.40
codegen_flags: <defaults>
</compile_context>

<pallas_src>
import math

import jax
import jax.numpy as jnp
from jax.experimental import pallas as pl
from jax.experimental.pallas import tpu as pltpu


# ----------------------------- helpers -------------------------------------
def _gelu(x):
    # tanh-approximate GELU (rides the otherwise-idle EUP slot).
    c = 0.7978845608028654  # sqrt(2/pi)
    return 0.5 * x * (1.0 + jnp.tanh(c * (x + 0.044715 * x * x * x)))


def _round_up(x, m):
    return (x + m - 1) // m * m


def _pick_tile_n(n_unique):
    """Token tile: multiple of 16 (bf16 sublane packing); grid >= 2 when possible."""
    n_pad = _round_up(max(n_unique, 1), 16)
    if n_pad < 32:
        return n_pad                          # one tiny block, nothing to split
    t = min(256, (n_pad // 2) // 16 * 16)     # >= 2 programs -> megacore split on v7x
    return max(16, t)


# ----------------------------- kernel --------------------------------------
def _prior_net_kernel(y_ref, w1_ref, b1_ref, w2_ref, b2_ref, wh_ref, bh_ref,
                      out_ref):
    latent = out_ref.shape[-1] // 2

    # bf16 x bf16 -> f32 is the native MXU mode; bias/GELU/clamp stay in f32.
    x = y_ref[...].astype(jnp.bfloat16)
    h = jnp.dot(x, w1_ref[...], preferred_element_type=jnp.float32) + b1_ref[...]
    h = _gelu(h)
    h = jnp.dot(h.astype(jnp.bfloat16), w2_ref[...],
                preferred_element_type=jnp.float32) + b2_ref[...]
    h = _gelu(h)
    # fc3 is folded into the fused heads:  out[:, :L] = mu,  out[:, L:] = logvar.
    out = jnp.dot(h.astype(jnp.bfloat16), wh_ref[...],
                  preferred_element_type=jnp.float32) + bh_ref[...]

    # Clamp only the logvar half; column-select avoids sub-vreg slices.
    col = jax.lax.broadcasted_iota(jnp.int32, out.shape, dimension=1)
    out = jnp.where(col >= latent, jnp.clip(out, -6.0, -2.2), out)
    out_ref[...] = out.astype(out_ref.dtype)


# ----------------------------- wrapper -------------------------------------
def prior_net_forward(y, params, *, tile_n=None, vmem_limit_bytes=None):
    w1, b1 = params["w1"], params["b1"]
    w2, b2 = params["w2"], params["b2"]
    w3, b3 = params["w3"], params["b3"]
    wmu, bmu = params["wmu"], params["bmu"]
    wlv, blv = params["wlv"], params["blv"]

    y_dim, hidden = w1.shape
    latent = wmu.shape[1]

    # ---- fold fc3 into the fused heads (no nonlinearity after fc3) ------------
    # In a real pipeline do this once at param load; here it is a single HxH @ Hx2L
    # matmul per call (negligible).  f32 HIGHEST keeps the fold forward-exact.
    hp = jax.lax.Precision.HIGHEST
    w_cat = jnp.concatenate([wmu, wlv], axis=1)                   # (H, 2L)
    b_cat = jnp.concatenate([bmu, blv], axis=1)                   # (1, 2L)
    w_heads = jnp.dot(w3, w_cat, precision=hp)                    # (H, 2L)
    b_heads = jnp.dot(b3, w_cat, precision=hp) + b_cat            # (1, 2L)

    # bf16 weights once (native MXU operand dtype); biases stay f32.
    w1_b = w1.astype(jnp.bfloat16)
    w2_b = w2.astype(jnp.bfloat16)
    wh_b = w_heads.astype(jnp.bfloat16)
    b1_f = b1.astype(jnp.float32)
    b2_f = b2.astype(jnp.float32)
    bh_f = b_heads.astype(jnp.float32)

    # ---- dedupe: run the MLP on the unique pre-repeat rows only ---------------
    # torch: y.repeat(1, 90, 1)[:, :268, :] tiles the pre-repeat rows along dim 1
    # (a 2-D y is implicitly promoted to (1, B, y_dim)); every layer is per-row,
    # so we tile/slice the latent-wide OUTPUTS instead of the inputs.
    if y.ndim == 2:
        b_out, s0 = 1, y.shape[0]
        y_unique = y
    else:
        b_out, s0 = y.shape[0], y.shape[1]
        y_unique = y.reshape(b_out * s0, y_dim)
    n_unique = y_unique.shape[0]

    if tile_n is None:
        tile_n = _pick_tile_n(n_unique)
    if tile_n <= 0 or tile_n % 16 != 0:
        raise ValueError(f"tile_n must be a positive multiple of 16, got {tile_n}")

    n_pad = _round_up(n_unique, tile_n)
    if n_pad != n_unique:
        y_unique = jnp.pad(y_unique, ((0, n_pad - n_unique), (0, 0)))  # rows discarded

    grid = (n_pad // tile_n,)

    if vmem_limit_bytes is None:
        # Actual working set (bf16 weights + f32 biases + double-buffered I/O tiles
        # + f32 intermediates), x2 headroom, 2 MiB floor — tiny vs 64-128 MiB VMEM.
        w_bytes = 2 * (y_dim * hidden + hidden * hidden + hidden * 2 * latent)
        b_bytes = 4 * (2 * hidden + 2 * latent)
        io_bytes = 4 * tile_n * (y_dim + 2 * latent) * 2
        act_bytes = 4 * tile_n * hidden * 2
        vmem_limit_bytes = max(2 << 20,
                               2 * (w_bytes + b_bytes + io_bytes + act_bytes))

    def resident(a):
        return pl.BlockSpec(a.shape, lambda i: (0, 0))   # fetched once, stays in VMEM

    out = pl.pallas_call(
        _prior_net_kernel,
        out_shape=jax.ShapeDtypeStruct((n_pad, 2 * latent), y.dtype),
        grid_spec=pltpu.PrefetchScalarGridSpec(
            num_scalar_prefetch=0,
            grid=grid,
            in_specs=[
                pl.BlockSpec((tile_n, y_dim), lambda i: (i, 0)),
                resident(w1_b), resident(b1_f),
                resident(w2_b), resident(b2_f),
                resident(wh_b), resident(bh_f),
            ],
            out_specs=pl.BlockSpec((tile_n, 2 * latent), lambda i: (i, 0)),
        ),
        compiler_params=pltpu.CompilerParams(
            dimension_semantics=("parallel",),            # megacore split on v7x
            vmem_limit_bytes=int(vmem_limit_bytes),
        ),
    )(y_unique, w1_b, b1_f, w2_b, b2_f, wh_b, bh_f)

    out = out[:n_unique]
    mu_u = out[:, :latent].reshape(b_out, s0, latent)
    lv_u = out[:, latent:].reshape(b_out, s0, latent)

    # Apply the repeat/slice to the (latent-wide) outputs — identical row pattern
    # to torch's repeat(1, 90, 1)[:, :268, :] on the inputs.
    mu = jnp.tile(mu_u, (1, 90, 1))[:, :268, :]
    lv = jnp.tile(lv_u, (1, 90, 1))[:, :268, :]
    return mu, lv


# ------------------------- pure-JAX reference -------------------------------
def _reference(y, params):
    """Unfused f32 reference on the full repeat-first path (validates dedupe+fold)."""
    if y.ndim == 2:
        y_rep = jnp.tile(y[None, :, :], (1, 90, 1))[:, :268, :]
    else:
        y_rep = jnp.tile(y, (1, 90, 1))[:, :268, :]
    hp = jax.lax.Precision.HIGHEST
    x = y_rep.astype(jnp.float32)
    h = _gelu(jnp.dot(x, params["w1"], precision=hp) + params["b1"])
    h = _gelu(jnp.dot(h, params["w2"], precision=hp) + params["b2"])
    h = jnp.dot(h, params["w3"], precision=hp) + params["b3"]
    mu = jnp.dot(h, params["wmu"], precision=hp) + params["bmu"]
    lv = jnp.dot(h, params["wlv"], precision=hp) + params["blv"]
    lv = jnp.clip(lv, -6.0, -2.2)
    return mu.astype(y.dtype), lv.astype(y.dtype)


# ------------------------------- main ---------------------------------------
if __name__ == "__main__":
    B, Y_DIM, HIDDEN, LATENT = 4, 16, 256, 16   # hidden_dim default of the module

    key = jax.random.PRNGKey(0)
    ks = jax.random.split(key, 12)
    y = jax.random.normal(ks[0], (B, Y_DIM), jnp.float32)

    def lin_init(kw, kb, fan_in, fan_out):
        bound = 1.0 / math.sqrt(fan_in)
        w = jax.random.uniform(kw, (fan_in, fan_out), jnp.float32, -bound, bound)
        b = jax.random.uniform(kb, (1, fan_out), jnp.float32, -bound, bound)
        return w, b

    w1, b1 = lin_init(ks[1], ks[2], Y_DIM, HIDDEN)
    w2, b2 = lin_init(ks[3], ks[4], HIDDEN, HIDDEN)
    w3, b3 = lin_init(ks[5], ks[6], HIDDEN, HIDDEN)
    wmu, bmu = lin_init(ks[7], ks[8], HIDDEN, LATENT)
    wlv, _ = lin_init(ks[9], ks[10], HIDDEN, LATENT)
    blv = jnp.full((1, LATENT), -3.0, jnp.float32)  # nn.init.constant_(fc_logvar.bias, -3.0)

    params = dict(w1=w1, b1=b1, w2=w2, b2=b2, w3=w3, b3=b3,
                  wmu=wmu, bmu=bmu, wlv=wlv, blv=blv)

    mu_p, lv_p = prior_net_forward(y, params)
    mu_p, lv_p = jax.block_until_ready((mu_p, lv_p))

    mu_ref, lv_ref = _reference(y, params)

    assert mu_p.shape == mu_ref.shape and lv_p.shape == lv_ref.shape, \
        (mu_p.shape, mu_ref.shape, lv_p.shape, lv_ref.shape)
    # 1e-2 tolerance: kernel uses native bf16xbf16->f32 MXU matmuls vs. the f32
    # HIGHEST-precision reference (observed deviation is a few 1e-3).
    assert jnp.allclose(mu_p, mu_ref, rtol=1e-2, atol=1e-2), \
        float(jnp.max(jnp.abs(mu_p - mu_ref)))
    assert jnp.allclose(lv_p, lv_ref, rtol=1e-2, atol=1e-2), \
        float(jnp.max(jnp.abs(lv_p - lv_ref)))

    print("KERNEL_OK")
</pallas_src>

<mosaic_0001>
module attributes {stable_mosaic.version = 11 : i64} {
  func.func @_prior_net_kernel(%arg0: i32, %arg1: memref<16x16xf32, #tpu.memory_space<vmem>>, %arg2: memref<16x256xbf16, #tpu.memory_space<vmem>>, %arg3: memref<1x256xf32, #tpu.memory_space<vmem>>, %arg4: memref<256x256xbf16, #tpu.memory_space<vmem>>, %arg5: memref<1x256xf32, #tpu.memory_space<vmem>>, %arg6: memref<256x32xbf16, #tpu.memory_space<vmem>>, %arg7: memref<1x32xf32, #tpu.memory_space<vmem>>, %arg8: memref<16x32xf32, #tpu.memory_space<vmem>>) attributes {dimension_semantics = [#tpu.dimension_semantics<parallel>], iteration_bounds = array<i64: 1>, scalar_prefetch = 0 : i64, scratch_operands = 0 : i64, tpu.core_type = #tpu.core_type<tc>, window_params = [{transform_indices = @transform_0, window_bounds = array<i64: 16, 16>}, {pipeline_mode = #tpu.pipeline_mode<synchronous>, transform_indices = @transform_1, window_bounds = array<i64: 16, 256>}, {pipeline_mode = #tpu.pipeline_mode<synchronous>, transform_indices = @transform_2, window_bounds = array<i64: 1, 256>}, {pipeline_mode = #tpu.pipeline_mode<synchronous>, transform_indices = @transform_3, window_bounds = array<i64: 256, 256>}, {pipeline_mode = #tpu.pipeline_mode<synchronous>, transform_indices = @transform_4, window_bounds = array<i64: 1, 256>}, {pipeline_mode = #tpu.pipeline_mode<synchronous>, transform_indices = @transform_5, window_bounds = array<i64: 256, 32>}, {pipeline_mode = #tpu.pipeline_mode<synchronous>, transform_indices = @transform_6, window_bounds = array<i64: 1, 32>}, {transform_indices = @transform_7, window_bounds = array<i64: 16, 32>}]} {
    %c0 = arith.constant 0 : index
    %c0_0 = arith.constant 0 : index
    %0 = vector.load %arg1[%c0, %c0_0] : memref<16x16xf32, #tpu.memory_space<vmem>>, vector<16x16xf32>
    %1 = arith.truncf %0 : vector<16x16xf32> to vector<16x16xbf16>
    %c0_1 = arith.constant 0 : index
    %c0_2 = arith.constant 0 : index
    %2 = vector.load %arg2[%c0_1, %c0_2] : memref<16x256xbf16, #tpu.memory_space<vmem>>, vector<16x256xbf16>
    %cst = arith.constant dense<0.000000e+00> : vector<16x256xf32>
    %3 = tpu.matmul %1, %2, %cst {dimension_numbers = #tpu.dot_dimension_numbers<[1], [0], [0], [1], [0, 0, 1, 1], [], []>} : vector<16x16xbf16>, vector<16x256xbf16>, vector<16x256xf32> -> vector<16x256xf32>
    %c0_3 = arith.constant 0 : index
    %c0_4 = arith.constant 0 : index
    %4 = vector.load %arg3[%c0_3, %c0_4] : memref<1x256xf32, #tpu.memory_space<vmem>>, vector<1x256xf32>
    %5 = vector.broadcast %4 : vector<1x256xf32> to vector<16x256xf32>
    %6 = arith.addf %3, %5 : vector<16x256xf32>
    %cst_5 = arith.constant 5.000000e-01 : f32
    %7 = vector.broadcast %cst_5 : f32 to vector<16x256xf32>
    %8 = arith.mulf %7, %6 : vector<16x256xf32>
    %cst_6 = arith.constant 4.471500e-02 : f32
    %9 = vector.broadcast %cst_6 : f32 to vector<16x256xf32>
    %10 = arith.mulf %9, %6 : vector<16x256xf32>
    %11 = arith.mulf %10, %6 : vector<16x256xf32>
    %12 = arith.mulf %11, %6 : vector<16x256xf32>
    %13 = arith.addf %6, %12 : vector<16x256xf32>
    %cst_7 = arith.constant 0.797884583 : f32
    %14 = vector.broadcast %cst_7 : f32 to vector<16x256xf32>
    %15 = arith.mulf %14, %13 : vector<16x256xf32>
    %16 = math.tanh %15 : vector<16x256xf32>
    %cst_8 = arith.constant 1.000000e+00 : f32
    %17 = vector.broadcast %cst_8 : f32 to vector<16x256xf32>
    %18 = arith.addf %17, %16 : vector<16x256xf32>
    %19 = arith.mulf %8, %18 : vector<16x256xf32>
    %20 = arith.truncf %19 : vector<16x256xf32> to vector<16x256xbf16>
    %c0_9 = arith.constant 0 : index
    %c0_10 = arith.constant 0 : index
    %21 = vector.load %arg4[%c0_9, %c0_10] : memref<256x256xbf16, #tpu.memory_space<vmem>>, vector<256x256xbf16>
    %cst_11 = arith.constant dense<0.000000e+00> : vector<16x256xf32>
    %22 = tpu.matmul %20, %21, %cst_11 {dimension_numbers = #tpu.dot_dimension_numbers<[1], [0], [0], [1], [0, 0, 1, 1], [], []>} : vector<16x256xbf16>, vector<256x256xbf16>, vector<16x256xf32> -> vector<16x256xf32>
    %c0_12 = arith.constant 0 : index
    %c0_13 = arith.constant 0 : index
    %23 = vector.load %arg5[%c0_12, %c0_13] : memref<1x256xf32, #tpu.memory_space<vmem>>, vector<1x256xf32>
    %24 = vector.broadcast %23 : vector<1x256xf32> to vector<16x256xf32>
    %25 = arith.addf %22, %24 : vector<16x256xf32>
    %cst_14 = arith.constant 5.000000e-01 : f32
    %26 = vector.broadcast %cst_14 : f32 to vector<16x256xf32>
    %27 = arith.mulf %26, %25 : vector<16x256xf32>
    %cst_15 = arith.constant 4.471500e-02 : f32
    %28 = vector.broadcast %cst_15 : f32 to vector<16x256xf32>
    %29 = arith.mulf %28, %25 : vector<16x256xf32>
    %30 = arith.mulf %29, %25 : vector<16x256xf32>
    %31 = arith.mulf %30, %25 : vector<16x256xf32>
    %32 = arith.addf %25, %31 : vector<16x256xf32>
    %cst_16 = arith.constant 0.797884583 : f32
    %33 = vector.broadcast %cst_16 : f32 to vector<16x256xf32>
    %34 = arith.mulf %33, %32 : vector<16x256xf32>
    %35 = math.tanh %34 : vector<16x256xf32>
    %cst_17 = arith.constant 1.000000e+00 : f32
    %36 = vector.broadcast %cst_17 : f32 to vector<16x256xf32>
    %37 = arith.addf %36, %35 : vector<16x256xf32>
    %38 = arith.mulf %27, %37 : vector<16x256xf32>
    %39 = arith.truncf %38 : vector<16x256xf32> to vector<16x256xbf16>
    %c0_18 = arith.constant 0 : index
    %c0_19 = arith.constant 0 : index
    %40 = vector.load %arg6[%c0_18, %c0_19] : memref<256x32xbf16, #tpu.memory_space<vmem>>, vector<256x32xbf16>
    %cst_20 = arith.constant dense<0.000000e+00> : vector<16x32xf32>
    %41 = tpu.matmul %39, %40, %cst_20 {dimension_numbers = #tpu.dot_dimension_numbers<[1], [0], [0], [1], [0, 0, 1, 1], [], []>} : vector<16x256xbf16>, vector<256x32xbf16>, vector<16x32xf32> -> vector<16x32xf32>
    %c0_21 = arith.constant 0 : index
    %c0_22 = arith.constant 0 : index
    %42 = vector.load %arg7[%c0_21, %c0_22] : memref<1x32xf32, #tpu.memory_space<vmem>>, vector<1x32xf32>
    %43 = vector.broadcast %42 : vector<1x32xf32> to vector<16x32xf32>
    %44 = arith.addf %41, %43 : vector<16x32xf32>
    %45 = tpu.iota {dimensions = array<i32: 1>} : vector<16x32xi32>
    %c16_i32 = arith.constant 16 : i32
    %46 = vector.broadcast %c16_i32 : i32 to vector<16x32xi32>
    %47 = arith.cmpi sge, %45, %46 : vector<16x32xi32>
    %cst_23 = arith.constant -6.000000e+00 : f32
    %cst_24 = arith.constant -2.200000e+00 : f32
    %48 = vector.broadcast %cst_23 : f32 to vector<16x32xf32>
    %49 = arith.maximumf %48, %44 : vector<16x32xf32>
    %50 = vector.broadcast %cst_24 : f32 to vector<16x32xf32>
    %51 = arith.minimumf %50, %49 : vector<16x32xf32>
    %52 = arith.select %47, %51, %44 : vector<16x32xi1>, vector<16x32xf32>
    %c0_25 = arith.constant 0 : index
    %c0_26 = arith.constant 0 : index
    %53 = vector.load %arg8[%c0_25, %c0_26] : memref<16x32xf32, #tpu.memory_space<vmem>>, vector<16x32xf32>
    tpu.vector_store %arg8[%c0_25, %c0_26], %52 {strides = array<i32>} : memref<16x32xf32, #tpu.memory_space<vmem>>, vector<16x32xf32>,
    return
  }
  func.func @transform_0(%arg0: i32) -> (i32, i32) {
    %c0_i32 = arith.constant 0 : i32
    %c0_i32_0 = arith.constant 0 : i32
    return %arg0, %c0_i32 : i32, i32
  }
  func.func @transform_1(%arg0: i32) -> (i32, i32) {
    %c0_i32 = arith.constant 0 : i32
    %c0_i32_0 = arith.constant 0 : i32
    %c0_i32_1 = arith.constant 0 : i32
    return %c0_i32, %c0_i32_0 : i32, i32
  }
  func.func @transform_2(%arg0: i32) -> (i32, i32) {
    %c0_i32 = arith.constant 0 : i32
    %c0_i32_0 = arith.constant 0 : i32
    %c0_i32_1 = arith.constant 0 : i32
    return %c0_i32, %c0_i32_0 : i32, i32
  }
  func.func @transform_3(%arg0: i32) -> (i32, i32) {
    %c0_i32 = arith.constant 0 : i32
    %c0_i32_0 = arith.constant 0 : i32
    %c0_i32_1 = arith.constant 0 : i32
    return %c0_i32, %c0_i32_0 : i32, i32
  }
  func.func @transform_4(%arg0: i32) -> (i32, i32) {
    %c0_i32 = arith.constant 0 : i32
    %c0_i32_0 = arith.constant 0 : i32
    %c0_i32_1 = arith.constant 0 : i32
    return %c0_i32, %c0_i32_0 : i32, i32
  }
  func.func @transform_5(%arg0: i32) -> (i32, i32) {
    %c0_i32 = arith.constant 0 : i32
    %c0_i32_0 = arith.constant 0 : i32
    %c0_i32_1 = arith.constant 0 : i32
    return %c0_i32, %c0_i32_0 : i32, i32
  }
  func.func @transform_6(%arg0: i32) -> (i32, i32) {
    %c0_i32 = arith.constant 0 : i32
    %c0_i32_0 = arith.constant 0 : i32
    %c0_i32_1 = arith.constant 0 : i32
    return %c0_i32, %c0_i32_0 : i32, i32
  }
  func.func @transform_7(%arg0: i32) -> (i32, i32) {
    %c0_i32 = arith.constant 0 : i32
    %c0_i32_0 = arith.constant 0 : i32
    return %arg0, %c0_i32 : i32, i32
  }
}

</mosaic_0001>

<llo_original>
// kernel: tpu_custom_call.1
$region0: #{tpu_custom_call.1}
  #allocation0 [shape = 'u32[]', space=smem, size = 0x4, offset = 0x4, fixed_abs, tag = 'smem constant byte address 0x4 - core index']
  #allocation1 [shape = 'u32[72,128]{1,0:T(1,128)}', space=vmem, size = 0x9000, scoped, tag = 'internal scratch']
  %s0 = inlined_call_operand.vmem [shape: f32[16,16], index: 0, kind: input, shape index: {}]
  %s1 = inlined_call_operand.vmem [shape: bf16[16,256], index: 1, kind: input, shape index: {}]
  %s2 = inlined_call_operand.vmem [shape: f32[1,256], index: 2, kind: input, shape index: {}]
  %s3 = inlined_call_operand.hbm [shape: bf16[256,256], index: 3, kind: input, shape index: {}]
  %s4 = inlined_call_operand.vmem [shape: f32[1,256], index: 4, kind: input, shape index: {}]
  %s5 = inlined_call_operand.vmem [shape: bf16[256,32], index: 5, kind: input, shape index: {}]
  %s6 = inlined_call_operand.vmem [shape: f32[1,32], index: 6, kind: input, shape index: {}]
  %s7 = inlined_call_operand.hbm [shape: f32[16,32], index: 7, kind: output, shape index: {}]
  %s8 = sld [smem:[#allocation0]]
  $region42: #{tpu_custom_call.1} parent=0
    _
  %s10 = ssub.s32 1, %s8
  %s11 = scalar_select 0, %s10, %s8
  $region1: #{tpu_custom_call.1} parent=0
    #allocation2 [shape = 'u8[131072]{0}', space=vmem, size = 0x20000, scoped, tag = 'input window, operand 3, single buffered']
    #allocation3 [shape = 's32[1]{0}', space=sflag, size = 0x4, scoped, tag = 'scoped memory for tpu_custom_call.1']
    #allocation4 [shape = 's32[1]{0}', space=sflag, size = 0x4, scoped, tag = 'scoped memory for tpu_custom_call.1']
    #allocation5 [shape = 'u8[8192]{0}', space=vmem, size = 0x2000, scoped, tag = 'output window, operand 0, single buffered']
    %12 = vsyncpa [#allocation3], 0
    %13 = vsyncpa [#allocation4], 0
    // Predicated region
    $region2: #{tpu_custom_call.1} parent=1 // pred_check
      _
    $region3: #{tpu_custom_call.1} parent=1 // pred_check_branch
      %15 = sbr.rel (0) target = $region5
    $region4: #{tpu_custom_call.1} parent=1 // pred_region
      _
    $region5: #{tpu_custom_call.1} parent=1 // pred_fallthru
      _
    // Predicated region
    $region6: #{tpu_custom_call.1} parent=1 // pred_check
      _
    $region7: #{tpu_custom_call.1} parent=1 // pred_check_branch
      %17 = sbr.rel (0) target = $region9
    $region8: #{tpu_custom_call.1} parent=1 // pred_region
      _
    $region9: #{tpu_custom_call.1} parent=1 // pred_fallthru
      _
    // Predicated region
    $region10: #{tpu_custom_call.1} parent=1 // pred_check
      _
    $region11: #{tpu_custom_call.1} parent=1 // pred_check_branch
      %19 = sbr.rel (0) target = $region13
    $region12: #{tpu_custom_call.1} parent=1 // pred_region
      _
    $region13: #{tpu_custom_call.1} parent=1 // pred_fallthru
      _
    // Predicated region
    $region14: #{tpu_custom_call.1} parent=1 // pred_check
      _
    $region15: #{tpu_custom_call.1} parent=1 // pred_check_branch
      %21 = sbr.rel (0) target = $region17
    $region16: #{tpu_custom_call.1} parent=1 // pred_region
      %23 = vsyncadd [#allocation3], 0
      %s24 = sshll.u32 %s3, 4
      %s25 = int_to_ptr.hbm [resolvable:$true] %s24
      %s26 = sshll.u32 [#allocation2], 4
      %s27 = int_to_ptr.vmem [resolvable:$true] %s26
      %32 = dma.hbm_to_vmem [thread:$0]  %s25, 4096, %s27, [#allocation3], 128, 128, 8
    $region17: #{tpu_custom_call.1} parent=1 // pred_fallthru
      _
    // Predicated region
    $region18: #{tpu_custom_call.1} parent=1 // pred_check
      _
    $region19: #{tpu_custom_call.1} parent=1 // pred_check_branch
      %34 = sbr.rel (0) target = $region21
    $region20: #{tpu_custom_call.1} parent=1 // pred_region
      _
    $region21: #{tpu_custom_call.1} parent=1 // pred_fallthru
      _
    // Predicated region
    $region22: #{tpu_custom_call.1} parent=1 // pred_check
      _
    $region23: #{tpu_custom_call.1} parent=1 // pred_check_branch
      %36 = sbr.rel (0) target = $region25
    $region24: #{tpu_custom_call.1} parent=1 // pred_region
      _
    $region25: #{tpu_custom_call.1} parent=1 // pred_fallthru
      _
    // Predicated region
    $region26: #{tpu_custom_call.1} parent=1 // pred_check
      _
    $region27: #{tpu_custom_call.1} parent=1 // pred_check_branch
      %38 = sbr.rel (0) target = $region29
    $region28: #{tpu_custom_call.1} parent=1 // pred_region
      _
    $region29: #{tpu_custom_call.1} parent=1 // pred_fallthru
      _
    // Predicated region
    $region30: #{tpu_custom_call.1} parent=1 // pred_check
      _
    $region31: #{tpu_custom_call.1} parent=1 // pred_check_branch
      %40 = sbr.rel (0) target = $region33
    $region32: #{tpu_custom_call.1} parent=1 // pred_region
      %42 = dma.done [#allocation3], 4096
    $region33: #{tpu_custom_call.1} parent=1 // pred_fallthru
      _
    %v44 = vld [vmem:[%s0] sm:$0xff]
    %v45 = vld [vmem:[%s0 + $0x8] sm:$0xff]
    %v46 = vpack.c.bf16 %v45, %v44
    %v47 = vld [vmem:[%s1] sm:$0xff]
    %v48 = vld [vmem:[%s1 + $0x8] sm:$0xff]
    %v49 = vld [vmem:[%s2] sm:$0x3]
    %v51 = vperm.slane %v49, 0
    %v52 = vperm.slane %v49, 1
    %v57 = vunpack.c.l.b16 %v47
    %v58 = vunpack.c.h.b16 %v47
    %v59 = vunpack.c.l.b16 %v48
    %v60 = vunpack.c.h.b16 %v48
    %v61 = vpack.c.b16 %v59, %v57
    %v62 = vpack.c.b16 %v60, %v58
    %vm65 = vcmask 130048
    %v67 = vsel %vm65, %v46, 0
    %69 = vmatpush.bf16.msra.mxu0 0
    %70 = vmatpush.bf16.msra.mxu0 0
    %71 = vmatpush.bf16.msra.mxu0 0
    %72 = vmatpush.bf16.msra.mxu0 0
    %73 = vmatpush.bf16.msra.mxu0 0
    %74 = vmatpush.bf16.msra.mxu0 0
    %75 = vmatpush.bf16.msra.mxu0 0
    %76 = vmatpush.bf16.msra.mxu0 %v61
    %77 = vmatmul.bf16.gmra.mxu0 %v67
    %v78 = vpop.f32.mrf.mxu0
    %v79 = vadd.f32 %v51, %v78
    %v80 = vpop.f32.mrf.mxu0
    %v81 = vadd.f32 %v51, %v80
    %82 = vdwg.mxu0
    %83 = vmatpush.bf16.msra.mxu0 0
    %84 = vmatpush.bf16.msra.mxu0 0
    %85 = vmatpush.bf16.msra.mxu0 0
    %86 = vmatpush.bf16.msra.mxu0 0
    %87 = vmatpush.bf16.msra.mxu0 0
    %88 = vmatpush.bf16.msra.mxu0 0
    %89 = vmatpush.bf16.msra.mxu0 0
    %90 = vmatpush.bf16.msra.mxu0 %v62
    %91 = vmatmul.bf16.gmra.mxu0 %v67
    %v92 = vpop.f32.mrf.mxu0
    %v93 = vadd.f32 %v52, %v92
    %v94 = vpop.f32.mrf.mxu0
    %v95 = vadd.f32 %v52, %v94
    %96 = vdwg.mxu0
    %v97 = vmul.f32 %v79, 0.5
    %v98 = vmul.f32 %v93, 0.5
    %v99 = vmul.f32 %v81, 0.5
    %v100 = vmul.f32 %v95, 0.5
    %v101 = vmul.f32 %v79, 0.044715
    %v102 = vmul.f32 %v93, 0.044715
    %v103 = vmul.f32 %v81, 0.044715
    %v104 = vmul.f32 %v95, 0.044715
    %v105 = vmul.f32 %v101, %v79
    %v106 = vmul.f32 %v102, %v93
    %v107 = vmul.f32 %v103, %v81
    %v108 = vmul.f32 %v104, %v95
    %v109 = vmul.f32 %v105, %v79
    %v110 = vmul.f32 %v106, %v93
    %v111 = vmul.f32 %v107, %v81
    %v112 = vmul.f32 %v108, %v95
    %v113 = vadd.f32 %v79, %v109
    %v114 = vadd.f32 %v93, %v110
    %v115 = vadd.f32 %v81, %v111
    %v116 = vadd.f32 %v95, %v112
    %v117 = vmul.f32 %v113, 0.7978846
    %v118 = vmul.f32 %v114, 0.7978846
    %v119 = vmul.f32 %v115, 0.7978846
    %v120 = vmul.f32 %v116, 0.7978846
    %v121 = vtanh.pop %v117
    %v122 = vtanh.pop %v118
    %v123 = vtanh.pop %v119
    %v124 = vtanh.pop %v120
    %v125 = vadd.f32 %v121, 1.0
    %v126 = vadd.f32 %v122, 1.0
    %v127 = vadd.f32 %v123, 1.0
    %v128 = vadd.f32 %v124, 1.0
    %v129 = vmul.f32 %v97, %v125
    %v130 = vmul.f32 %v98, %v126
    %v131 = vmul.f32 %v99, %v127
    %v132 = vmul.f32 %v100, %v128
    %v133 = vpack.c.bf16 %v131, %v129
    %v134 = vpack.c.bf16 %v132, %v130
    %v135 = vld [vmem:[#allocation2] sm:$0xff]
    %v136 = vld [vmem:[#allocation2 + $0x8] sm:$0xff]
    %v137 = vld [vmem:[#allocation2 + $0x10] sm:$0xff]
    %v138 = vld [vmem:[#allocation2 + $0x18] sm:$0xff]
    %v139 = vld [vmem:[#allocation2 + $0x20] sm:$0xff]
    %v140 = vld [vmem:[#allocation2 + $0x28] sm:$0xff]
    %v141 = vld [vmem:[#allocation2 + $0x30] sm:$0xff]
    %v142 = vld [vmem:[#allocation2 + $0x38] sm:$0xff]
    %v143 = vld [vmem:[#allocation2 + $0x40] sm:$0xff]
    %v144 = vld [vmem:[#allocation2 + $0x48] sm:$0xff]
    %v145 = vld [vmem:[#allocation2 + $0x50] sm:$0xff]
    %v146 = vld [vmem:[#allocation2 + $0x58] sm:$0xff]
    %v147 = vld [vmem:[#allocation2 + $0x60] sm:$0xff]
    %v148 = vld [vmem:[#allocation2 + $0x68] sm:$0xff]
    %v149 = vld [vmem:[#allocation2 + $0x70] sm:$0xff]
    %v150 = vld [vmem:[#allocation2 + $0x78] sm:$0xff]
    %v151 = vld [vmem:[#allocation2 + $0x80] sm:$0xff]
    %v152 = vld [vmem:[#allocation2 + $0x88] sm:$0xff]
    %v153 = vld [vmem:[#allocation2 + $0x90] sm:$0xff]
    %v154 = vld [vmem:[#allocation2 + $0x98] sm:$0xff]
    %v155 = vld [vmem:[#allocation2 + $0xa0] sm:$0xff]
    %v156 = vld [vmem:[#allocation2 + $0xa8] sm:$0xff]
    %v157 = vld [vmem:[#allocation2 + $0xb0] sm:$0xff]
    %v158 = vld [vmem:[#allocation2 + $0xb8] sm:$0xff]
    %v159 = vld [vmem:[#allocation2 + $0xc0] sm:$0xff]
    %v160 = vld [vmem:[#allocation2 + $0xc8] sm:$0xff]
    %v161 = vld [vmem:[#allocation2 + $0xd0] sm:$0xff]
    %v162 = vld [vmem:[#allocation2 + $0xd8] sm:$0xff]
    %v163 = vld [vmem:[#allocation2 + $0xe0] sm:$0xff]
    %v164 = vld [vmem:[#allocation2 + $0xe8] sm:$0xff]
    %v165 = vld [vmem:[#allocation2 + $0xf0] sm:$0xff]
    %v166 = vld [vmem:[#allocation2 + $0xf8] sm:$0xff]
    %v167 = vld [vmem:[%s4] sm:$0x3]
    %v169 = vperm.slane %v167, 0
    %v170 = vperm.slane %v167, 1
    %v205 = vunpack.c.l.b16 %v135
    %v206 = vunpack.c.h.b16 %v135
    %v207 = vunpack.c.l.b16 %v136
    %v208 = vunpack.c.h.b16 %v136
    %v209 = vunpack.c.l.b16 %v137
    %v210 = vunpack.c.h.b16 %v137
    %v211 = vunpack.c.l.b16 %v138
    %v212 = vunpack.c.h.b16 %v138
    %v213 = vunpack.c.l.b16 %v139
    %v214 = vunpack.c.h.b16 %v139
    %v215 = vunpack.c.l.b16 %v140
    %v216 = vunpack.c.h.b16 %v140
    %v217 = vunpack.c.l.b16 %v141
    %v218 = vunpack.c.h.b16 %v141
    %v219 = vunpack.c.l.b16 %v142
    %v220 = vunpack.c.h.b16 %v142
    %v221 = vunpack.c.l.b16 %v143
    %v222 = vunpack.c.h.b16 %v143
    %v223 = vunpack.c.l.b16 %v144
    %v224 = vunpack.c.h.b16 %v144
    %v225 = vunpack.c.l.b16 %v145
    %v226 = vunpack.c.h.b16 %v145
    %v227 = vunpack.c.l.b16 %v146
    %v228 = vunpack.c.h.b16 %v146
    %v229 = vunpack.c.l.b16 %v147
    %v230 = vunpack.c.h.b16 %v147
    %v231 = vunpack.c.l.b16 %v148
    %v232 = vunpack.c.h.b16 %v148
    %v233 = vunpack.c.l.b16 %v149
    %v234 = vunpack.c.h.b16 %v149
    %v235 = vunpack.c.l.b16 %v150
    %v236 = vunpack.c.h.b16 %v150
    %v237 = vunpack.c.l.b16 %v151
    %v238 = vunpack.c.h.b16 %v151
    %v239 = vunpack.c.l.b16 %v152
    %v240 = vunpack.c.h.b16 %v152
    %v241 = vunpack.c.l.b16 %v153
    %v242 = vunpack.c.h.b16 %v153
    %v243 = vunpack.c.l.b16 %v154
    %v244 = vunpack.c.h.b16 %v154
    %v245 = vunpack.c.l.b16 %v155
    %v246 = vunpack.c.h.b16 %v155
    %v247 = vunpack.c.l.b16 %v156
    %v248 = vunpack.c.h.b16 %v156
    %v249 = vunpack.c.l.b16 %v157
    %v250 = vunpack.c.h.b16 %v157
    %v251 = vunpack.c.l.b16 %v158
    %v252 = vunpack.c.h.b16 %v158
    %v253 = vunpack.c.l.b16 %v159
    %v254 = vunpack.c.h.b16 %v159
    %v255 = vunpack.c.l.b16 %v160
    %v256 = vunpack.c.h.b16 %v160
    %v257 = vunpack.c.l.b16 %v161
    %v258 = vunpack.c.h.b16 %v161
    %v259 = vunpack.c.l.b16 %v162
    %v260 = vunpack.c.h.b16 %v162
    %v261 = vunpack.c.l.b16 %v163
    %v262 = vunpack.c.h.b16 %v163
    %v263 = vunpack.c.l.b16 %v164
    %v264 = vunpack.c.h.b16 %v164
    %v265 = vunpack.c.l.b16 %v165
    %v266 = vunpack.c.h.b16 %v165
    %v267 = vunpack.c.l.b16 %v166
    %v268 = vunpack.c.h.b16 %v166
    %v269 = vpack.c.b16 %v207, %v205
    %v270 = vpack.c.b16 %v208, %v206
    %v271 = vpack.c.b16 %v211, %v209
    %v272 = vpack.c.b16 %v212, %v210
    %v273 = vpack.c.b16 %v215, %v213
    %v274 = vpack.c.b16 %v216, %v214
    %v275 = vpack.c.b16 %v219, %v217
    %v276 = vpack.c.b16 %v220, %v218
    %v277 = vpack.c.b16 %v223, %v221
    %v278 = vpack.c.b16 %v224, %v222
    %v279 = vpack.c.b16 %v227, %v225
    %v280 = vpack.c.b16 %v228, %v226
    %v281 = vpack.c.b16 %v231, %v229
    %v282 = vpack.c.b16 %v232, %v230
    %v283 = vpack.c.b16 %v235, %v233
    %v284 = vpack.c.b16 %v236, %v234
    %v285 = vpack.c.b16 %v239, %v237
    %v286 = vpack.c.b16 %v240, %v238
    %v287 = vpack.c.b16 %v243, %v241
    %v288 = vpack.c.b16 %v244, %v242
    %v289 = vpack.c.b16 %v247, %v245
    %v290 = vpack.c.b16 %v248, %v246
    %v291 = vpack.c.b16 %v251, %v249
    %v292 = vpack.c.b16 %v252, %v250
    %v293 = vpack.c.b16 %v255, %v253
    %v294 = vpack.c.b16 %v256, %v254
    %v295 = vpack.c.b16 %v259, %v257
    %v296 = vpack.c.b16 %v260, %v258
    %v297 = vpack.c.b16 %v263, %v261
    %v298 = vpack.c.b16 %v264, %v262
    %v299 = vpack.c.b16 %v267, %v265
    %v300 = vpack.c.b16 %v268, %v266
    %333 = vmatpush.bf16.msra.mxu0 %v283
    %334 = vmatpush.bf16.msra.mxu0 %v281
    %335 = vmatpush.bf16.msra.mxu0 %v279
    %336 = vmatpush.bf16.msra.mxu0 %v277
    %337 = vmatpush.bf16.msra.mxu0 %v275
    %338 = vmatpush.bf16.msra.mxu0 %v273
    %339 = vmatpush.bf16.msra.mxu0 %v271
    %340 = vmatpush.bf16.msra.mxu0 %v269
    %341 = vmatmul.bf16.gmra.mxu0 %v133
    %v342 = vpop.f32.mrf.mxu0
    %v343 = vadd.f32 %v169, %v342
    %v344 = vpop.f32.mrf.mxu0
    %v345 = vadd.f32 %v169, %v344
    %346 = vdwg.mxu0
    %347 = vmatpush.bf16.msra.mxu0 %v299
    %348 = vmatpush.bf16.msra.mxu0 %v297
    %349 = vmatpush.bf16.msra.mxu0 %v295
    %350 = vmatpush.bf16.msra.mxu0 %v293
    %351 = vmatpush.bf16.msra.mxu0 %v291
    %352 = vmatpush.bf16.msra.mxu0 %v289
    %353 = vmatpush.bf16.msra.mxu0 %v287
    %354 = vmatpush.bf16.msra.mxu0 %v285
    %355 = vmatmul.bf16.gmra.mxu0 %v134
    %v356 = vpop.f32.mrf.mxu0
    %v357 = vadd.f32 %v343, %v356
    %v358 = vpop.f32.mrf.mxu0
    %v359 = vadd.f32 %v345, %v358
    %360 = vdwg.mxu0
    %361 = vmatpush.bf16.msra.mxu0 %v284
    %362 = vmatpush.bf16.msra.mxu0 %v282
    %363 = vmatpush.bf16.msra.mxu0 %v280
    %364 = vmatpush.bf16.msra.mxu0 %v278
    %365 = vmatpush.bf16.msra.mxu0 %v276
    %366 = vmatpush.bf16.msra.mxu0 %v274
    %367 = vmatpush.bf16.msra.mxu0 %v272
    %368 = vmatpush.bf16.msra.mxu0 %v270
    %369 = vmatmul.bf16.gmra.mxu0 %v133
    %v370 = vpop.f32.mrf.mxu0
    %v371 = vadd.f32 %v170, %v370
    %v372 = vpop.f32.mrf.mxu0
    %v373 = vadd.f32 %v170, %v372
    %374 = vdwg.mxu0
    %375 = vmatpush.bf16.msra.mxu0 %v300
    %376 = vmatpush.bf16.msra.mxu0 %v298
    %377 = vmatpush.bf16.msra.mxu0 %v296
    %378 = vmatpush.bf16.msra.mxu0 %v294
    %379 = vmatpush.bf16.msra.mxu0 %v292
    %380 = vmatpush.bf16.msra.mxu0 %v290
    %381 = vmatpush.bf16.msra.mxu0 %v288
    %382 = vmatpush.bf16.msra.mxu0 %v286
    %383 = vmatmul.bf16.gmra.mxu0 %v134
    %v384 = vpop.f32.mrf.mxu0
    %v385 = vadd.f32 %v371, %v384
    %v386 = vpop.f32.mrf.mxu0
    %v387 = vadd.f32 %v373, %v386
    %388 = vdwg.mxu0
    %v389 = vmul.f32 %v357, 0.5
    %v390 = vmul.f32 %v385, 0.5
    %v391 = vmul.f32 %v359, 0.5
    %v392 = vmul.f32 %v387, 0.5
    %v393 = vmul.f32 %v357, 0.044715
    %v394 = vmul.f32 %v385, 0.044715
    %v395 = vmul.f32 %v359, 0.044715
    %v396 = vmul.f32 %v387, 0.044715
    %v397 = vmul.f32 %v393, %v357
    %v398 = vmul.f32 %v394, %v385
    %v399 = vmul.f32 %v395, %v359
    %v400 = vmul.f32 %v396, %v387
    %v401 = vmul.f32 %v397, %v357
    %v402 = vmul.f32 %v398, %v385
    %v403 = vmul.f32 %v399, %v359
    %v404 = vmul.f32 %v400, %v387
    %v405 = vadd.f32 %v357, %v401
    %v406 = vadd.f32 %v385, %v402
    %v407 = vadd.f32 %v359, %v403
    %v408 = vadd.f32 %v387, %v404
    %v409 = vmul.f32 %v405, 0.7978846
    %v410 = vmul.f32 %v406, 0.7978846
    %v411 = vmul.f32 %v407, 0.7978846
    %v412 = vmul.f32 %v408, 0.7978846
    %v413 = vtanh.pop %v409
    %v414 = vtanh.pop %v410
    %v415 = vtanh.pop %v411
    %v416 = vtanh.pop %v412
    %v417 = vadd.f32 %v413, 1.0
    %v418 = vadd.f32 %v414, 1.0
    %v419 = vadd.f32 %v415, 1.0
    %v420 = vadd.f32 %v416, 1.0
    %v421 = vmul.f32 %v389, %v417
    %v422 = vmul.f32 %v390, %v418
    %v423 = vmul.f32 %v391, %v419
    %v424 = vmul.f32 %v392, %v420
    %v425 = vpack.c.bf16 %v423, %v421
    %v426 = vpack.c.bf16 %v424, %v422
    %v427 = vld [vmem:[%s5] sm:$0xf]
    %v428 = vld [vmem:[%s5 + $0x4] sm:$0xf]
    %v429 = vld [vmem:[%s5 + $0x8] sm:$0xf]
    %v430 = vld [vmem:[%s5 + $0xc] sm:$0xf]
    %v431 = vld [vmem:[%s5 + $0x10] sm:$0xf]
    %v432 = vld [vmem:[%s5 + $0x14] sm:$0xf]
    %v433 = vld [vmem:[%s5 + $0x18] sm:$0xf]
    %v434 = vld [vmem:[%s5 + $0x1c] sm:$0xf]
    %v435 = vld [vmem:[%s5 + $0x20] sm:$0xf]
    %v436 = vld [vmem:[%s5 + $0x24] sm:$0xf]
    %v437 = vld [vmem:[%s5 + $0x28] sm:$0xf]
    %v438 = vld [vmem:[%s5 + $0x2c] sm:$0xf]
    %v439 = vld [vmem:[%s5 + $0x30] sm:$0xf]
    %v440 = vld [vmem:[%s5 + $0x34] sm:$0xf]
    %v441 = vld [vmem:[%s5 + $0x38] sm:$0xf]
    %v442 = vld [vmem:[%s5 + $0x3c] sm:$0xf]
    %v443 = vld [vmem:[%s5 + $0x40] sm:$0xf]
    %v444 = vld [vmem:[%s5 + $0x44] sm:$0xf]
    %v445 = vld [vmem:[%s5 + $0x48] sm:$0xf]
    %v446 = vld [vmem:[%s5 + $0x4c] sm:$0xf]
    %v447 = vld [vmem:[%s5 + $0x50] sm:$0xf]
    %v448 = vld [vmem:[%s5 + $0x54] sm:$0xf]
    %v449 = vld [vmem:[%s5 + $0x58] sm:$0xf]
    %v450 = vld [vmem:[%s5 + $0x5c] sm:$0xf]
    %v451 = vld [vmem:[%s5 + $0x60] sm:$0xf]
    %v452 = vld [vmem:[%s5 + $0x64] sm:$0xf]
    %v453 = vld [vmem:[%s5 + $0x68] sm:$0xf]
    %v454 = vld [vmem:[%s5 + $0x6c] sm:$0xf]
    %v455 = vld [vmem:[%s5 + $0x70] sm:$0xf]
    %v456 = vld [vmem:[%s5 + $0x74] sm:$0xf]
    %v457 = vld [vmem:[%s5 + $0x78] sm:$0xf]
    %v458 = vld [vmem:[%s5 + $0x7c] sm:$0xf]
    %v459 = vld [vmem:[%s6] sm:$0x1]
    %v461 = vperm.slane %v459, 0
    %v495 = vunpack.c.l.b16 %v427
    %v496 = vunpack.c.l.b16 %v428
    %v497 = vunpack.c.l.b16 %v429
    %v498 = vunpack.c.l.b16 %v430
    %v499 = vunpack.c.l.b16 %v431
    %v500 = vunpack.c.l.b16 %v432
    %v501 = vunpack.c.l.b16 %v433
    %v502 = vunpack.c.l.b16 %v434
    %v503 = vunpack.c.l.b16 %v435
    %v504 = vunpack.c.l.b16 %v436
    %v505 = vunpack.c.l.b16 %v437
    %v506 = vunpack.c.l.b16 %v438
    %v507 = vunpack.c.l.b16 %v439
    %v508 = vunpack.c.l.b16 %v440
    %v509 = vunpack.c.l.b16 %v441
    %v510 = vunpack.c.l.b16 %v442
    %v511 = vunpack.c.l.b16 %v443
    %v512 = vunpack.c.l.b16 %v444
    %v513 = vunpack.c.l.b16 %v445
    %v514 = vunpack.c.l.b16 %v446
    %v515 = vunpack.c.l.b16 %v447
    %v516 = vunpack.c.l.b16 %v448
    %v517 = vunpack.c.l.b16 %v449
    %v518 = vunpack.c.l.b16 %v450
    %v519 = vunpack.c.l.b16 %v451
    %v520 = vunpack.c.l.b16 %v452
    %v521 = vunpack.c.l.b16 %v453
    %v522 = vunpack.c.l.b16 %v454
    %v523 = vunpack.c.l.b16 %v455
    %v524 = vunpack.c.l.b16 %v456
    %v525 = vunpack.c.l.b16 %v457
    %v526 = vunpack.c.l.b16 %v458
    %v527 = vpack.c.b16 %v496, %v495
    %v528 = vpack.c.b16 %v498, %v497
    %v529 = vpack.c.b16 %v500, %v499
    %v530 = vpack.c.b16 %v502, %v501
    %v531 = vpack.c.b16 %v504, %v503
    %v532 = vpack.c.b16 %v506, %v505
    %v533 = vpack.c.b16 %v508, %v507
    %v534 = vpack.c.b16 %v510, %v509
    %v535 = vpack.c.b16 %v512, %v511
    %v536 = vpack.c.b16 %v514, %v513
    %v537 = vpack.c.b16 %v516, %v515
    %v538 = vpack.c.b16 %v518, %v517
    %v539 = vpack.c.b16 %v520, %v519
    %v540 = vpack.c.b16 %v522, %v521
    %v541 = vpack.c.b16 %v524, %v523
    %v542 = vpack.c.b16 %v526, %v525
    %559 = vmatpush.bf16.msra.mxu0 %v534
    %560 = vmatpush.bf16.msra.mxu0 %v533
    %561 = vmatpush.bf16.msra.mxu0 %v532
    %562 = vmatpush.bf16.msra.mxu0 %v531
    %563 = vmatpush.bf16.msra.mxu0 %v530
    %564 = vmatpush.bf16.msra.mxu0 %v529
    %565 = vmatpush.bf16.msra.mxu0 %v528
    %566 = vmatpush.bf16.msra.mxu0 %v527
    %567 = vmatmul.bf16.gmra.mxu0 %v425
    %v568 = vpop.f32.mrf.mxu0
    %v569 = vadd.f32 %v461, %v568
    %v570 = vpop.f32.mrf.mxu0
    %v571 = vadd.f32 %v461, %v570
    %572 = vdwg.mxu0
    %573 = vmatpush.bf16.msra.mxu0 %v542
    %574 = vmatpush.bf16.msra.mxu0 %v541
    %575 = vmatpush.bf16.msra.mxu0 %v540
    %576 = vmatpush.bf16.msra.mxu0 %v539
    %577 = vmatpush.bf16.msra.mxu0 %v538
    %578 = vmatpush.bf16.msra.mxu0 %v537
    %579 = vmatpush.bf16.msra.mxu0 %v536
    %580 = vmatpush.bf16.msra.mxu0 %v535
    %581 = vmatmul.bf16.gmra.mxu0 %v426
    %v582 = vpop.f32.mrf.mxu0
    %v583 = vadd.f32 %v569, %v582
    %v584 = vpop.f32.mrf.mxu0
    %v585 = vadd.f32 %v571, %v584
    %586 = vdwg.mxu0
    %v587 = vlaneseq
    %v588 = vand.u32 %v587, 127
    %vm589 = vcmp.ge.s32.totalorder %v588, 16
    %v590 = vmax.f32 %v583, -6.0
    %v591 = vmax.f32 %v585, -6.0
    %v592 = vmin.f32 %v590, -2.2
    %v593 = vmin.f32 %v591, -2.2
    %v594 = vsel %vm589, %v592, %v583
    %v595 = vsel %vm589, %v593, %v585
    %vm596 = vcmask 261120
    %597 = vst.msk [vmem:[#allocation5] sm:$0xff] %vm596, %v594
    %598 = vst.msk [vmem:[#allocation5 + $0x8] sm:$0xff] %vm596, %v595
    // Predicated region
    $region34: #{tpu_custom_call.1} parent=1 // pred_check
      _
    $region35: #{tpu_custom_call.1} parent=1 // pred_check_branch
      %600 = sbr.rel (0) target = $region37
    $region36: #{tpu_custom_call.1} parent=1 // pred_region
      %602 = vsyncadd [#allocation4], 0
      %s603 = sshll.u32 [#allocation5], 4
      %s604 = int_to_ptr.vmem [resolvable:$true] %s603
      %s605 = sshll.u32 %s7, 4
      %s606 = int_to_ptr.hbm [resolvable:$true] %s605
      %611 = dma.vmem_to_hbm [thread:$0]  %s604, 256, %s606, [#allocation4], 128, 128, 8
    $region37: #{tpu_custom_call.1} parent=1 // pred_fallthru
      _
    // Predicated region
    $region38: #{tpu_custom_call.1} parent=1 // pred_check
      _
    $region39: #{tpu_custom_call.1} parent=1 // pred_check_branch
      %613 = sbr.rel (0) target = $region41
    $region40: #{tpu_custom_call.1} parent=1 // pred_region
      %615 = dma.done [#allocation4], 256
    $region41: #{tpu_custom_call.1} parent=1 // pred_fallthru
      _
    %616 = vsyncpa [#allocation3], 1
    %617 = vsyncpa [#allocation4], 1

</llo_original>
